<compile_context>
chip_gen: v7x
topology: tpu7x:2x2x1
jax: 0.10.0
libtpu: 0.0.40
codegen_flags: <defaults>
</compile_context>

<pallas_src>
import functools

import jax
import jax.numpy as jnp
from jax import lax
from jax.experimental import pallas as pl
from jax.experimental.pallas import tpu as pltpu


def _round_up(x, m):
    return ((x + m - 1) // m) * m


def _vmem_capacity_bytes():
    """Physical VMEM per TensorCore; conservative (v7x, 64 MiB) if unknown."""
    try:
        info = pltpu.get_tpu_info()
        cap = getattr(info, "vmem_capacity_bytes", None)
        if cap:
            return int(cap)
    except Exception:
        pass
    return 64 * 1024 * 1024


def _pick_tile_rows(rows, hw, itemsize, target_block_bytes, vmem_budget_bytes):
    """Row tile (multiple of 8) for the single-pass kernel."""
    if rows <= 8:
        return rows
    row_block_bytes = max(1, hw * itemsize)
    # 2x input + 2x output double buffers + ~2 block-sized f32 temporaries.
    row_foot_bytes = max(1, hw * (4 * itemsize + 8))
    tile = (target_block_bytes // row_block_bytes) // 8 * 8
    tile_vmem = (vmem_budget_bytes // row_foot_bytes) // 8 * 8
    tile = max(8, min(tile, tile_vmem))
    # Keep >= min(8, rows//8) grid steps: the parallel axis can be split across
    # TensorCores (v7x has 2) and the DMA pipeline has iterations to overlap.
    min_steps = max(1, min(8, rows // 8))
    tile = min(tile, max(8, (rows // min_steps) // 8 * 8))
    tile = min(tile, _round_up(rows, 8))
    return tile


def _pick_tile_hw(hw, tile_r, itemsize, target_block_bytes, vmem_budget_bytes):
    """hw tile (multiple of 128) for the two-pass (large-hw) fallback."""
    col_block_bytes = max(1, tile_r * itemsize)
    col_foot_bytes = max(1, tile_r * (4 * itemsize + 8))
    t = (target_block_bytes // col_block_bytes) // 128 * 128
    t_vmem = (vmem_budget_bytes // col_foot_bytes) // 128 * 128
    t = max(128, min(t, t_vmem))
    return min(t, _round_up(hw, 128))


# ----------------------------- single-pass kernel ---------------------------
def _ean_kernel(x_ref, ab_ref, o_ref, *, gn_eps, hw):
    # x_ref block: (tile_r, hw). Each row is an independent GroupNorm instance.
    xf = x_ref[...].astype(jnp.float32)                 # f32 stats for bf16 inputs
    inv_n = 1.0 / hw
    s1 = jnp.sum(xf, axis=-1, keepdims=True)            # (tile_r, 1)
    s2 = jnp.sum(xf * xf, axis=-1, keepdims=True)
    mean = s1 * inv_n
    var = jnp.maximum(s2 * inv_n - mean * mean, 0.0)     # clamp one-pass cancellation
    rstd = lax.rsqrt(var + gn_eps)
    a = ab_ref[:, 0:1]                                   # 0.5*alpha*omega*gamma
    b = ab_ref[:, 1:2]                                   # 0.5*(alpha*omega*beta+sigma)
    s = a * rstd                                         # per-row scalars
    t = b - s * mean
    z = s * xf + t                                       # == 0.5 * gate pre-activation
    att = jnp.tanh(z) * 0.5 + 0.5                        # == sigmoid(2z), one EUP op
    o_ref[...] = (xf * att).astype(o_ref.dtype)


# ------------------------- two-pass (large hw) fallback ----------------------
def _ean_stats_kernel(x_ref, ab_ref, st_ref, *, gn_eps, hw, tile_hw, mask_hw):
    j = pl.program_id(1)

    @pl.when(j == 0)
    def _():
        st_ref[...] = jnp.zeros_like(st_ref)

    xf = x_ref[...].astype(jnp.float32)
    if mask_hw:
        # Ragged last hw block: zero out lanes beyond the true extent so they
        # do not contaminate the sums.
        rem = hw - j * tile_hw
        lane = lax.broadcasted_iota(jnp.int32, xf.shape, 1)
        xf = jnp.where(lane < rem, xf, 0.0)
    st_ref[:, 0:1] += jnp.sum(xf, axis=-1, keepdims=True)
    st_ref[:, 1:2] += jnp.sum(xf * xf, axis=-1, keepdims=True)

    @pl.when(j == pl.num_programs(1) - 1)
    def _():
        inv_n = 1.0 / hw
        mean = st_ref[:, 0:1] * inv_n
        var = jnp.maximum(st_ref[:, 1:2] * inv_n - mean * mean, 0.0)
        rstd = lax.rsqrt(var + gn_eps)
        s = ab_ref[:, 0:1] * rstd
        t = ab_ref[:, 1:2] - s * mean
        st_ref[:, 0:1] = s
        st_ref[:, 1:2] = t


def _ean_apply_kernel(x_ref, st_ref, o_ref):
    xf = x_ref[...].astype(jnp.float32)
    s = st_ref[:, 0:1]
    t = st_ref[:, 1:2]
    att = jnp.tanh(s * xf + t) * 0.5 + 0.5
    o_ref[...] = (xf * att).astype(o_ref.dtype)


# --------------------------------- wrapper -----------------------------------
def ean_forward(x, gn_weight, gn_bias, alpha, sigma, *, groups=8, eps=1e-5,
                gn_eps=1e-5, force_multipass=False):
    """EAN forward. x: (b, c, h, w) NCHW, like the PyTorch module."""
    b, c, h, w = x.shape
    assert c % groups == 0, "channels must be divisible by groups"
    cg = c // groups
    bg = b * groups
    hw = h * w
    rows = b * c

    # (b,c,h,w) -> (b*g, c/g, h, w) -> (rows=b*c, hw).  Row r is channel
    # (r % cg) of group-sample (r // cg); kept in the input HBM dtype.
    xr = x.reshape(rows, hw)

    # Fold all affine / gate constants (incl. the 0.5 of sigmoid(z)=0.5*tanh(0.5z)+0.5)
    # into two per-row f32 scalars packed as one (rows, 2) input:
    #   omega  = gamma / sqrt(sum(gamma**2 + eps))            (matches torch exactly)
    #   pre    = alpha*omega*(gamma*xhat + beta) + sigma = 2*(a_ch*xhat + b_ch)
    gamma = gn_weight.astype(jnp.float32)
    beta = gn_bias.astype(jnp.float32)
    omega = gamma / jnp.sqrt(jnp.sum(gamma * gamma + eps))
    scale = alpha.astype(jnp.float32).reshape(()) * omega
    a_ch = 0.5 * scale * gamma
    b_ch = 0.5 * (scale * beta + sigma.astype(jnp.float32).reshape(()))
    ab = jnp.stack([jnp.tile(a_ch, bg), jnp.tile(b_ch, bg)], axis=-1)   # (rows, 2)

    itemsize = xr.dtype.itemsize
    vmem_cap = _vmem_capacity_bytes()
    if vmem_cap <= 80 * 1024 * 1024:         # v7x-class: 64 MiB per TensorCore
        target_block_bytes = 2 << 20
        vmem_limit = min(44 << 20, int(vmem_cap * 0.7))
    else:                                    # v5e / v6e: 128 MiB per TensorCore
        target_block_bytes = 6 << 20
        vmem_limit = 80 << 20
    budget = int(vmem_limit * 0.75)          # leave headroom for compiler scratch

    # Minimum single-pass block is 8 rows x full hw; if its footprint (double
    # buffers + f32 temporaries) does not fit, tile hw with the two-pass path.
    tr_min = rows if rows < 8 else 8
    single_pass_min_foot = tr_min * hw * (4 * itemsize + 8)
    use_multipass = force_multipass or (single_pass_min_foot > budget)

    if not use_multipass:
        tile_r = _pick_tile_rows(rows, hw, itemsize, target_block_bytes, budget)
        out = pl.pallas_call(
            functools.partial(_ean_kernel, gn_eps=gn_eps, hw=hw),
            out_shape=jax.ShapeDtypeStruct((rows, hw), x.dtype),
            grid_spec=pltpu.PrefetchScalarGridSpec(
                num_scalar_prefetch=0,
                grid=(pl.cdiv(rows, tile_r),),
                in_specs=[
                    pl.BlockSpec((tile_r, hw), lambda i: (i, 0)),   # x rows
                    pl.BlockSpec((tile_r, 2), lambda i: (i, 0)),    # packed (a, b)
                ],
                out_specs=pl.BlockSpec((tile_r, hw), lambda i: (i, 0)),
            ),
            compiler_params=pltpu.CompilerParams(
                dimension_semantics=("parallel",),
                vmem_limit_bytes=vmem_limit,
            ),
        )(xr, ab)
        return out.reshape(b, c, h, w)

    # ---- two-pass fallback: hw too large for a single full-row block --------
    tile_r = rows if rows < 8 else 8
    tile_hw = _pick_tile_hw(hw, tile_r, itemsize, target_block_bytes, budget)
    row_steps = pl.cdiv(rows, tile_r)
    hw_steps = pl.cdiv(hw, tile_hw)
    mask_hw = (hw % tile_hw) != 0

    # Pass 1: per-row sum / sum-of-squares reduction over hw, finalized into
    # the two per-row scalars (s, t).
    st = pl.pallas_call(
        functools.partial(_ean_stats_kernel, gn_eps=gn_eps, hw=hw,
                          tile_hw=tile_hw, mask_hw=mask_hw),
        out_shape=jax.ShapeDtypeStruct((rows, 2), jnp.float32),
        grid_spec=pltpu.PrefetchScalarGridSpec(
            num_scalar_prefetch=0,
            grid=(row_steps, hw_steps),
            in_specs=[
                pl.BlockSpec((tile_r, tile_hw), lambda i, j: (i, j)),
                pl.BlockSpec((tile_r, 2), lambda i, j: (i, 0)),
            ],
            out_specs=pl.BlockSpec((tile_r, 2), lambda i, j: (i, 0)),
        ),
        compiler_params=pltpu.CompilerParams(
            dimension_semantics=("parallel", "arbitrary"),
            vmem_limit_bytes=vmem_limit,
        ),
    )(xr, ab)

    # Pass 2: streaming apply of z = s*x + t; sigmoid; out = x*att.
    out = pl.pallas_call(
        _ean_apply_kernel,
        out_shape=jax.ShapeDtypeStruct((rows, hw), x.dtype),
        grid_spec=pltpu.PrefetchScalarGridSpec(
            num_scalar_prefetch=0,
            grid=(row_steps, hw_steps),
            in_specs=[
                pl.BlockSpec((tile_r, tile_hw), lambda i, j: (i, j)),
                pl.BlockSpec((tile_r, 2), lambda i, j: (i, 0)),
            ],
            out_specs=pl.BlockSpec((tile_r, tile_hw), lambda i, j: (i, j)),
        ),
        compiler_params=pltpu.CompilerParams(
            dimension_semantics=("parallel", "parallel"),
            vmem_limit_bytes=vmem_limit,
        ),
    )(xr, st)
    return out.reshape(b, c, h, w)


def ean_reference(x, gn_weight, gn_bias, alpha, sigma, *, groups=8, eps=1e-5,
                  gn_eps=1e-5):
    """Pure-JAX reference mirroring the PyTorch forward (f32)."""
    x = x.astype(jnp.float32)
    b, c, h, w = x.shape
    cg = c // groups
    gx = x.reshape(b * groups, cg, h, w)
    mean = gx.mean(axis=(2, 3), keepdims=True)
    var = gx.var(axis=(2, 3), keepdims=True)      # biased, like GroupNorm
    gn = (gx - mean) / jnp.sqrt(var + gn_eps)
    gn = gn * gn_weight.reshape(1, cg, 1, 1) + gn_bias.reshape(1, cg, 1, 1)
    omega = gn_weight / jnp.sqrt(jnp.sum(gn_weight ** 2 + eps))
    att = jax.nn.sigmoid(
        alpha.reshape(()) * omega.reshape(1, cg, 1, 1) * gn + sigma.reshape(()))
    return (gx * att).reshape(b, c, h, w)


if __name__ == "__main__":
    key = jax.random.PRNGKey(0)
    k_x, k_w, k_b, k_a, k_s, k_x2 = jax.random.split(key, 6)

    groups, eps = 8, 1e-5
    b, c, h, w = 2, 16, 16, 16            # c divisible by groups=8 -> cg=2
    cg = c // groups

    x = jax.random.normal(k_x, (b, c, h, w), dtype=jnp.float32)

    # Deterministic synthetic parameters (module init is gamma=1, beta=0,
    # alpha=1, sigma=0; perturb to exercise every term of the forward).
    gn_weight = 1.0 + 0.1 * jax.random.normal(k_w, (cg,), dtype=jnp.float32)
    gn_bias = 0.1 * jax.random.normal(k_b, (cg,), dtype=jnp.float32)
    alpha = 1.0 + 0.05 * jax.random.normal(k_a, (1,), dtype=jnp.float32)
    sigma = 0.05 * jax.random.normal(k_s, (1,), dtype=jnp.float32)

    ref = ean_reference(x, gn_weight, gn_bias, alpha, sigma, groups=groups, eps=eps)

    # float32 single-pass path
    out = jax.block_until_ready(
        ean_forward(x, gn_weight, gn_bias, alpha, sigma, groups=groups, eps=eps))
    assert out.shape == (b, c, h, w) and out.dtype == x.dtype
    assert jnp.allclose(out, ref, rtol=1e-4, atol=1e-4), (
        float(jnp.max(jnp.abs(out - ref))))

    # bfloat16 single-pass path (bf16 in HBM, f32 statistics in the kernel)
    x_bf16 = x.astype(jnp.bfloat16)
    out_bf16 = jax.block_until_ready(
        ean_forward(x_bf16, gn_weight, gn_bias, alpha, sigma, groups=groups, eps=eps))
    assert out_bf16.dtype == jnp.bfloat16
    ref_bf16 = ean_reference(x_bf16.astype(jnp.float32), gn_weight, gn_bias,
                             alpha, sigma, groups=groups, eps=eps)
    assert jnp.allclose(out_bf16.astype(jnp.float32), ref_bf16,
                        rtol=5e-2, atol=5e-2), (
        float(jnp.max(jnp.abs(out_bf16.astype(jnp.float32) - ref_bf16))))

    # Large-h*w fallback path, forced at a small shape (hw=400, not /128,
    # exercises hw tiling, accumulation and ragged-edge masking).
    h2, w2 = 20, 20
    x2 = jax.random.normal(k_x2, (b, c, h2, w2), dtype=jnp.float32)
    ref2 = ean_reference(x2, gn_weight, gn_bias, alpha, sigma, groups=groups, eps=eps)
    out2 = jax.block_until_ready(
        ean_forward(x2, gn_weight, gn_bias, alpha, sigma, groups=groups, eps=eps,
                    force_multipass=True))
    assert jnp.allclose(out2, ref2, rtol=1e-4, atol=1e-4), (
        float(jnp.max(jnp.abs(out2 - ref2))))

    print("KERNEL_OK")
</pallas_src>

<mosaic_0001>
module attributes {stable_mosaic.version = 11 : i64} {
  func.func @_ean_kernel(%arg0: i32, %arg1: memref<8x256xf32, #tpu.memory_space<vmem>>, %arg2: memref<8x2xf32, #tpu.memory_space<vmem>>, %arg3: memref<8x256xf32, #tpu.memory_space<vmem>>) attributes {dimension_semantics = [#tpu.dimension_semantics<parallel>], iteration_bounds = array<i64: 4>, scalar_prefetch = 0 : i64, scratch_operands = 0 : i64, tpu.core_type = #tpu.core_type<tc>, window_params = [{transform_indices = @transform_0, window_bounds = array<i64: 8, 256>}, {transform_indices = @transform_1, window_bounds = array<i64: 8, 2>}, {transform_indices = @transform_2, window_bounds = array<i64: 8, 256>}]} {
    %c0 = arith.constant 0 : index
    %c0_0 = arith.constant 0 : index
    %0 = vector.load %arg1[%c0, %c0_0] : memref<8x256xf32, #tpu.memory_space<vmem>>, vector<8x256xf32>
    %cst = arith.constant dense<0.000000e+00> : vector<8xf32>
    %1 = vector.multi_reduction <add>, %0, %cst [1] : vector<8x256xf32> to vector<8xf32>
    %2 = vector.shape_cast %1 : vector<8xf32> to vector<8x1xf32>
    %3 = arith.mulf %0, %0 : vector<8x256xf32>
    %cst_1 = arith.constant dense<0.000000e+00> : vector<8xf32>
    %4 = vector.multi_reduction <add>, %3, %cst_1 [1] : vector<8x256xf32> to vector<8xf32>
    %5 = vector.shape_cast %4 : vector<8xf32> to vector<8x1xf32>
    %cst_2 = arith.constant 3.906250e-03 : f32
    %6 = vector.broadcast %cst_2 : f32 to vector<8x1xf32>
    %7 = arith.mulf %2, %6 : vector<8x1xf32>
    %cst_3 = arith.constant 3.906250e-03 : f32
    %8 = vector.broadcast %cst_3 : f32 to vector<8x1xf32>
    %9 = arith.mulf %5, %8 : vector<8x1xf32>
    %10 = arith.mulf %7, %7 : vector<8x1xf32>
    %11 = arith.subf %9, %10 : vector<8x1xf32>
    %cst_4 = arith.constant 0.000000e+00 : f32
    %12 = vector.broadcast %cst_4 : f32 to vector<8x1xf32>
    %13 = arith.maximumf %11, %12 : vector<8x1xf32>
    %cst_5 = arith.constant 9.99999974E-6 : f32
    %14 = vector.broadcast %cst_5 : f32 to vector<8x1xf32>
    %15 = arith.addf %13, %14 : vector<8x1xf32>
    %16 = math.rsqrt %15 : vector<8x1xf32>
    %c0_6 = arith.constant 0 : index
    %c0_7 = arith.constant 0 : index
    %17 = vector.load %arg2[%c0_6, %c0_7] : memref<8x2xf32, #tpu.memory_space<vmem>>, vector<8x1xf32>
    %c0_8 = arith.constant 0 : index
    %c1 = arith.constant 1 : index
    %18 = vector.load %arg2[%c0_8, %c1] : memref<8x2xf32, #tpu.memory_space<vmem>>, vector<8x1xf32>
    %19 = arith.mulf %17, %16 : vector<8x1xf32>
    %20 = arith.mulf %19, %7 : vector<8x1xf32>
    %21 = arith.subf %18, %20 : vector<8x1xf32>
    %22 = vector.broadcast %19 : vector<8x1xf32> to vector<8x256xf32>
    %23 = arith.mulf %22, %0 : vector<8x256xf32>
    %24 = vector.broadcast %21 : vector<8x1xf32> to vector<8x256xf32>
    %25 = arith.addf %23, %24 : vector<8x256xf32>
    %26 = math.tanh %25 : vector<8x256xf32>
    %cst_9 = arith.constant 5.000000e-01 : f32
    %27 = vector.broadcast %cst_9 : f32 to vector<8x256xf32>
    %28 = arith.mulf %26, %27 : vector<8x256xf32>
    %cst_10 = arith.constant 5.000000e-01 : f32
    %29 = vector.broadcast %cst_10 : f32 to vector<8x256xf32>
    %30 = arith.addf %28, %29 : vector<8x256xf32>
    %31 = arith.mulf %0, %30 : vector<8x256xf32>
    %c0_11 = arith.constant 0 : index
    %c0_12 = arith.constant 0 : index
    %32 = vector.load %arg3[%c0_11, %c0_12] : memref<8x256xf32, #tpu.memory_space<vmem>>, vector<8x256xf32>
    tpu.vector_store %arg3[%c0_11, %c0_12], %31 {strides = array<i32>} : memref<8x256xf32, #tpu.memory_space<vmem>>, vector<8x256xf32>,
    return
  }
  func.func @transform_0(%arg0: i32) -> (i32, i32) {
    %c0_i32 = arith.constant 0 : i32
    %c0_i32_0 = arith.constant 0 : i32
    return %arg0, %c0_i32 : i32, i32
  }
  func.func @transform_1(%arg0: i32) -> (i32, i32) {
    %c0_i32 = arith.constant 0 : i32
    %c0_i32_0 = arith.constant 0 : i32
    return %arg0, %c0_i32 : i32, i32
  }
  func.func @transform_2(%arg0: i32) -> (i32, i32) {
    %c0_i32 = arith.constant 0 : i32
    %c0_i32_0 = arith.constant 0 : i32
    return %arg0, %c0_i32 : i32, i32
  }
}

</mosaic_0001>

<llo_original>
// kernel: tpu_custom_call.1
$region0: #{tpu_custom_call.1}
  #allocation0 [shape = 'u32[]', space=smem, size = 0x4, offset = 0x4, fixed_abs, tag = 'smem constant byte address 0x4 - core index']
  #allocation1 [shape = 'u32[144,128]{1,0:T(1,128)}', space=vmem, size = 0x12000, scoped, tag = 'internal scratch']
  %s0 = inlined_call_operand.hbm [shape: f32[32,256], index: 0, kind: input, shape index: {}]
  %s1 = inlined_call_operand.vmem [shape: f32[32,2], index: 1, kind: input, shape index: {}]
  %s2 = inlined_call_operand.hbm [shape: f32[32,256], index: 2, kind: output, shape index: {}]
  %s3 = sld [smem:[#allocation0]]
  $region45: #{tpu_custom_call.1} parent=0
    _
  %s5 = ssub.s32 1, %s3
  %s6 = scalar_select 0, %s5, %s3
  $region1: #{tpu_custom_call.1} parent=0
    #allocation2 [shape = 'u8[16384]{0}', space=vmem, size = 0x4000, scoped, tag = 'input window, operand 0']
    #allocation3 [shape = 's32[2]{0}', space=sflag, size = 0x8, scoped, tag = 'scoped memory for tpu_custom_call.1']
    #allocation4 [shape = 's32[2]{0}', space=sflag, size = 0x8, scoped, tag = 'scoped memory for tpu_custom_call.1']
    #allocation5 [shape = 'u8[16384]{0}', space=vmem, size = 0x4000, scoped, tag = 'output window, operand 0']
    %7 = vsyncpa [#allocation3], 0
    %s8 = scalar_lea.sflag [#allocation3], 1
    %9 = vsyncpa %s8, 0
    %10 = vsyncpa [#allocation4], 0
    %s11 = scalar_lea.sflag [#allocation4], 1
    %12 = vsyncpa %s11, 0
    loop: start=0, step=1, limit=6
    $region2: #{tpu_custom_call.1} parent=1 // loop_pre_header
      _
    $region3: #{tpu_custom_call.1} parent=1 // loop_header
      %s14 = sphi 0, %s18
      %p15 = scmp.ge.s32.totalorder %s14, 6
      %s24 = sphi 0, %s26
      %s27 = sphi 0, %s24
      %s28 = sphi 0, %s27
      %s44 = sphi 0, %s28
      %s50 = sphi 0, %s52
      %s53 = sphi 0, %s50
      %s54 = sphi 0, %s53
      %s70 = sphi 0, %s54
      %s76 = sphi 0, %s78
      %s79 = sphi 0, %s76
      %s80 = sphi 0, %s79
      %s96 = sphi 0, %s80
    $region4: #{tpu_custom_call.1} parent=1 // loop_header_branch
      %17 = sbr.rel (%p15) target = $region8
    $region5: #{tpu_custom_call.1} parent=1 // loop_body
      %s19 = ssub.s32 %s14, 1
      %s20 = ssub.s32 %s14, 2
      %s21 = sadd.s32 %s14, 1
      %s22 = ssub.s32 %s14, %s21
      %p23 = scmp.eq.s32.totalorder %s22, 0
      %s25 = sadd.s32 %s24, 1
      %s26 = scalar_select %p23, %s24, %s25
      %p29 = pneg %p23
      %p30 = scmp.eq.s32.totalorder %s14, 3
      %p31 = por %p29, %p30
      %p32 = scmp.ne.s32.totalorder %s24, %s27
      %p33 = scmp.eq.s32.totalorder %s14, 0
      %p34 = por %p32, %p33
      %p35 = scmp.ne.s32.totalorder %s24, %s27
      %p36 = scmp.eq.s32.totalorder %s19, 3
      %p37 = por %p35, %p36
      %p38 = scmp.ne.s32.totalorder %s27, %s28
      %p39 = scmp.eq.s32.totalorder %s19, 0
      %p40 = por %p38, %p39
      %p41 = scmp.ne.s32.totalorder %s27, %s28
      %p42 = scmp.eq.s32.totalorder %s20, 3
      %p43 = por %p41, %p42
      %p45 = scmp.ne.s32.totalorder %s28, %s44
      %p46 = scmp.eq.s32.totalorder %s20, 0
      %p47 = por %p45, %p46
      %s48 = ssub.s32 %s14, %s21
      %p49 = scmp.eq.s32.totalorder %s48, 0
      %s51 = sadd.s32 %s50, 1
      %s52 = scalar_select %p49, %s50, %s51
      %p55 = pneg %p49
      %p56 = scmp.eq.s32.totalorder %s14, 3
      %p57 = por %p55, %p56
      %p58 = scmp.ne.s32.totalorder %s50, %s53
      %p59 = scmp.eq.s32.totalorder %s14, 0
      %p60 = por %p58, %p59
      %p61 = scmp.ne.s32.totalorder %s50, %s53
      %p62 = scmp.eq.s32.totalorder %s19, 3
      %p63 = por %p61, %p62
      %p64 = scmp.ne.s32.totalorder %s53, %s54
      %p65 = scmp.eq.s32.totalorder %s19, 0
      %p66 = por %p64, %p65
      %p67 = scmp.ne.s32.totalorder %s53, %s54
      %p68 = scmp.eq.s32.totalorder %s20, 3
      %p69 = por %p67, %p68
      %p71 = scmp.ne.s32.totalorder %s54, %s70
      %p72 = scmp.eq.s32.totalorder %s20, 0
      %p73 = por %p71, %p72
      %s74 = ssub.s32 %s14, %s21
      %p75 = scmp.eq.s32.totalorder %s74, 0
      %s77 = sadd.s32 %s76, 1
      %s78 = scalar_select %p75, %s76, %s77
      %p81 = pneg %p75
      %p82 = scmp.eq.s32.totalorder %s14, 3
      %p83 = por %p81, %p82
      %p84 = scmp.ne.s32.totalorder %s76, %s79
      %p85 = scmp.eq.s32.totalorder %s14, 0
      %p86 = por %p84, %p85
      %p87 = scmp.ne.s32.totalorder %s76, %s79
      %p88 = scmp.eq.s32.totalorder %s19, 3
      %p89 = por %p87, %p88
      %p90 = scmp.ne.s32.totalorder %s79, %s80
      %p91 = scmp.eq.s32.totalorder %s19, 0
      %p92 = por %p90, %p91
      %p93 = scmp.ne.s32.totalorder %s79, %s80
      %p94 = scmp.eq.s32.totalorder %s20, 3
      %p95 = por %p93, %p94
      %p97 = scmp.ne.s32.totalorder %s80, %s96
      %p98 = scmp.eq.s32.totalorder %s20, 0
      %p99 = por %p97, %p98
      %p100 = scmp.le.s32.totalorder 1, %s14
      %p101 = scmp.lt.s32.totalorder %s14, 5
      %p102 = pnand %p100, %p101
      %p103 = pneg %p102
      // Predicated region
      $region9: #{tpu_custom_call.1} parent=5 // pred_check
        _
      $region10: #{tpu_custom_call.1} parent=5 // pred_check_branch
        %105 = sbr.rel (%p102) target = $region12
      $region11: #{tpu_custom_call.1} parent=5 // pred_region
        %s106 = ssub.s32 %s14, 1
      $region12: #{tpu_custom_call.1} parent=5 // pred_fallthru
        _
      %p107 = scmp.lt.s32.totalorder %s14, 4
      // Predicated region
      $region13: #{tpu_custom_call.1} parent=5 // pred_check
        %p108 = pneg %p107
      $region14: #{tpu_custom_call.1} parent=5 // pred_check_branch
        %110 = sbr.rel (%p108) target = $region16
      $region15: #{tpu_custom_call.1} parent=5 // pred_region
        // Predicated region
        $region17: #{tpu_custom_call.1} parent=15 // pred_check
          %p111 = pneg %p34
        $region18: #{tpu_custom_call.1} parent=15 // pred_check_branch
          %113 = sbr.rel (%p111) target = $region20
        $region19: #{tpu_custom_call.1} parent=15 // pred_region
          %s114 = sand.u32 %s24, 1
          %s115 = scalar_lea.sflag [#allocation3], %s114
          %s116 = sand.u32 %s24, 1
          %s117 = smul.addr %s116, 16
          %s118 = scalar_lea.vmem [#allocation2], %s117
          %s120 = ssub.s32 256, 256
          %121 = vsyncadd %s115, %s120
          %s122 = smul.addr %s14, 2
          %s123 = smul.addr %s122, 128
          %s124 = scalar_lea.hbm %s0, %s123
          %s126 = sshll.u32 %s118, 4
          %s127 = int_to_ptr.vmem [resolvable:$true] %s126
          %129 = dma.hbm_to_vmem [thread:$0]  %s124, 256, %s127, %s115
        $region20: #{tpu_custom_call.1} parent=15 // pred_fallthru
          _
        // Predicated region
        $region21: #{tpu_custom_call.1} parent=15 // pred_check
          %p130 = pneg %p60
        $region22: #{tpu_custom_call.1} parent=15 // pred_check_branch
          %132 = sbr.rel (%p130) target = $region24
        $region23: #{tpu_custom_call.1} parent=15 // pred_region
          %p133 = scmp.lt.s32.totalorder %s14, 3
          %s134 = scalar_select %p133, %s14, 3
          %s135 = smul.addr %s134, 8
          %s136 = scalar_lea.vmem %s1, %s135
        $region24: #{tpu_custom_call.1} parent=15 // pred_fallthru
          _
      $region16: #{tpu_custom_call.1} parent=5 // pred_fallthru
        _
      %p137 = scmp.le.s32.totalorder 1, %s14
      %p138 = scmp.lt.s32.totalorder %s14, 5
      %p139 = pnand %p137, %p138
      %p140 = pneg %p139
      // Predicated region
      $region25: #{tpu_custom_call.1} parent=5 // pred_check
        _
      $region26: #{tpu_custom_call.1} parent=5 // pred_check_branch
        %142 = sbr.rel (%p139) target = $region28
      $region27: #{tpu_custom_call.1} parent=5 // pred_region
        %s143 = ssub.s32 %s14, 1
        %s144 = sand.u32 %s27, 1
        %s145 = scalar_lea.sflag [#allocation3], %s144
        %s146 = sand.u32 %s27, 1
        %s147 = smul.addr %s146, 16
        %s148 = scalar_lea.vmem [#allocation2], %s147
        // Predicated region
        $region29: #{tpu_custom_call.1} parent=27 // pred_check
          %p149 = pneg %p40
        $region30: #{tpu_custom_call.1} parent=27 // pred_check_branch
          %151 = sbr.rel (%p149) target = $region32
        $region31: #{tpu_custom_call.1} parent=27 // pred_region
          %152 = dma.done %s145, 256
        $region32: #{tpu_custom_call.1} parent=27 // pred_fallthru
          _
        %s153 = sand.u32 %s27, 1
        %s154 = scalar_lea.sflag [#allocation3], %s153
        %s155 = sand.u32 %s27, 1
        %s156 = smul.addr %s155, 16
        %s157 = scalar_lea.vmem [#allocation2], %s156
        %p158 = pneg %p40
        %p159 = pneg %p37
        %p160 = scmp.lt.s32.totalorder %s19, 3
        %s161 = scalar_select %p160, %s19, 3
        %s162 = smul.addr %s161, 8
        %s163 = scalar_lea.vmem %s1, %s162
        %p164 = pneg %p66
        %p165 = pneg %p63
        %p166 = pneg %p92
        %p167 = pneg %p89
        %s168 = sand.u32 %s79, 1
        %s169 = scalar_lea.sflag [#allocation4], %s168
        %s170 = sand.u32 %s79, 1
        %s171 = smul.addr %s170, 16
        %s172 = scalar_lea.vmem [#allocation5], %s171
        %p173 = scmp.lt.s32.totalorder %s19, 3
        %s174 = scalar_select %p173, %s19, 3
        %s175 = smul.addr %s174, 8
        %s176 = scalar_lea.vmem %s1, %s175
        %v177 = vld [vmem:[%s148] sm:$0xff]
        %v178 = vld [vmem:[%s148 + $0x8] sm:$0xff]
        %v179 = vadd.f32 %v177, %v178
        %180 = vadd.xlane.f32.xlu0 %v179
        %v181 = vpop.xlane.xlu0 %180
        %v182 = vmul.f32 %v177, %v177
        %v183 = vmul.f32 %v178, %v178
        %v184 = vadd.f32 %v182, %v183
        %185 = vadd.xlane.f32.xlu0 %v184
        %v186 = vpop.xlane.xlu0 %185
        %v187 = vmul.f32 %v181, 0.00390625
        %v188 = vmul.f32 %v186, 0.00390625
        %v189 = vmul.f32 %v187, %v187
        %v190 = vsub.f32 %v188, %v189
        %v191 = vmax.f32 %v190, 0.0
        %v192 = vadd.f32 %v191, 1e-05
        %v193 = vrsqrt.pop %v192
        %v194 = vld [vmem:[%s176] sm:$0xff]
        %v195 = vmul.f32 %v194, %v193
        %v196 = vmul.f32 %v195, %v187
        %198 = vrot.lane.b32.xlu0 %v196, 1
        %v199 = vpop.permute.xlu0 %198
        %v201 = vsub.f32 %v194, %v199
        %203 = vset.pattern.permute.xlu0 0
        %204 = vperm.xlu0 %203, %v195
        %v205 = vpop.permute.xlu0 %204
        %v207 = vmul.f32 %v205, %v177
        %v208 = vmul.f32 %v205, %v178
        %210 = vset.pattern.permute.xlu0 1
        %211 = vperm.xlu0 %210, %v201
        %v212 = vpop.permute.xlu0 %211
        %v214 = vadd.f32 %v207, %v212
        %v215 = vadd.f32 %v208, %v212
        %v216 = vtanh.pop %v214
        %v217 = vtanh.pop %v215
        %v218 = vmul.f32 %v216, 0.5
        %v219 = vmul.f32 %v217, 0.5
        %v220 = vadd.f32 %v218, 0.5
        %v221 = vadd.f32 %v219, 0.5
        %v222 = vmul.f32 %v177, %v220
        %v223 = vmul.f32 %v178, %v221
        %224 = vst [vmem:[%s172] sm:$0xff] %v222
        %225 = vst [vmem:[%s172 + $0x8] sm:$0xff] %v223
        %s226 = sand.u32 %s79, 1
        %s227 = scalar_lea.sflag [#allocation4], %s226
        %s228 = sand.u32 %s79, 1
        %s229 = smul.addr %s228, 16
        %s230 = scalar_lea.vmem [#allocation5], %s229
        // Predicated region
        $region33: #{tpu_custom_call.1} parent=27 // pred_check
          %p231 = pneg %p89
        $region34: #{tpu_custom_call.1} parent=27 // pred_check_branch
          %233 = sbr.rel (%p231) target = $region36
        $region35: #{tpu_custom_call.1} parent=27 // pred_region
          %s235 = ssub.s32 256, 256
          %236 = vsyncadd %s227, %s235
          %s237 = smul.addr %s19, 2
          %s238 = smul.addr %s237, 128
          %s239 = scalar_lea.hbm %s2, %s238
          %s241 = sshll.u32 %s230, 4
          %s242 = int_to_ptr.vmem [resolvable:$true] %s241
          %244 = dma.vmem_to_hbm [thread:$0]  %s242, 256, %s239, %s227
        $region36: #{tpu_custom_call.1} parent=27 // pred_fallthru
          _
      $region28: #{tpu_custom_call.1} parent=5 // pred_fallthru
        _
      %p245 = scmp.le.s32.totalorder 2, %s14
      // Predicated region
      $region37: #{tpu_custom_call.1} parent=5 // pred_check
        %p246 = pneg %p245
      $region38: #{tpu_custom_call.1} parent=5 // pred_check_branch
        %248 = sbr.rel (%p246) target = $region40
      $region39: #{tpu_custom_call.1} parent=5 // pred_region
        %s249 = ssub.s32 %s14, 2
        // Predicated region
        $region41: #{tpu_custom_call.1} parent=39 // pred_check
          %p250 = pneg %p95
        $region42: #{tpu_custom_call.1} parent=39 // pred_check_branch
          %252 = sbr.rel (%p250) target = $region44
        $region43: #{tpu_custom_call.1} parent=39 // pred_region
          %s253 = sand.u32 %s80, 1
          %s254 = scalar_lea.sflag [#allocation4], %s253
          %s255 = sand.u32 %s80, 1
          %s256 = smul.addr %s255, 16
          %s257 = scalar_lea.vmem [#allocation5], %s256
          %258 = dma.done %s254, 256
        $region44: #{tpu_custom_call.1} parent=39 // pred_fallthru
          _
      $region40: #{tpu_custom_call.1} parent=5 // pred_fallthru
        _
    $region6: #{tpu_custom_call.1} parent=1 // loop_footer
      %s18 = sadd.s32 1, %s14
    $region7: #{tpu_custom_call.1} parent=1 // loop_footer_branch
      %13 = sbr.rel target = $region3
    $region8: #{tpu_custom_call.1} parent=1 // loop_exit
      _
    %259 = vsyncpa [#allocation3], 1
    %s260 = scalar_lea.sflag [#allocation3], 1
    %261 = vsyncpa %s260, 1
    %262 = vsyncpa [#allocation4], 1
    %s263 = scalar_lea.sflag [#allocation4], 1
    %264 = vsyncpa %s263, 1

</llo_original>
